<compile_context>
chip_gen: v7x
topology: tpu7x:2x2x1
jax: 0.10.0
libtpu: 0.0.40
codegen_flags: <defaults>
</compile_context>

<pallas_src>
import functools

import jax
import jax.numpy as jnp
import numpy as np
from jax import lax
from jax.experimental import pallas as pl
from jax.experimental.pallas import tpu as pltpu


# ----------------------------------------------------------------------------
# Pallas kernel: fused scorer + SCST reward / mask / per-example loss
# ----------------------------------------------------------------------------
def _scst_loss_kernel(s_seqs_ref, g_seqs_ref, logp_ref,
                      reward_ref, score_ref, exloss_ref, *,
                      end_idx, target_token, inv_len):
    s_seqs = s_seqs_ref[...]                 # (L, TB) int32 sampled token ids
    g_seqs = g_seqs_ref[...]                 # (L, TB) int32 greedy token ids
    logp = logp_ref[...]                     # (L, TB) f32   sampled log-probs

    # Fused (synthetic) scorer: mean over L of (token == target_token).
    # TODO(synk): the real CIDEr/BLEU scorer over reference captions cannot be
    # fused; with a real scorer these would arrive as (1, B) score inputs.
    s_score = jnp.sum((s_seqs == target_token).astype(jnp.float32),
                      axis=0, keepdims=True) * inv_len          # (1, TB)
    g_score = jnp.sum((g_seqs == target_token).astype(jnp.float32),
                      axis=0, keepdims=True) * inv_len          # (1, TB)

    # reward = sampled_score - greedy_score   (self-critical baseline)
    reward = s_score - g_score                                  # (1, TB)
    reward_ref[...] = reward
    score_ref[...] = s_score

    # mask[t] = 1 if t == 0 else (sampled_seqs[t-1] != end_idx)
    mask_raw = (s_seqs != end_idx).astype(jnp.float32)          # (L, TB)
    row = lax.broadcasted_iota(jnp.int32, mask_raw.shape, 0)    # step index
    shifted = pltpu.roll(mask_raw, shift=1, axis=0)             # mask_raw[t-1]
    mask = jnp.where(row == 0, jnp.float32(1.0), shifted)

    # per-example loss: sum_t( -logp * reward * mask )  -> lane-dense (1, TB)
    loss_terms = -logp * reward * mask                          # (L, TB)
    exloss_ref[...] = jnp.sum(loss_terms, axis=0, keepdims=True)


def _pick_tile_b(B):
    """Batch (lane) tile: full B when small, else a 128-multiple dividing B."""
    if B <= 512:
        return B
    if B % 512 == 0:
        return 512
    if B % 256 == 0:
        return 256
    if B % 128 == 0:
        return 128
    return B


def scst_loss_pallas(sampled_seqs, greedy_seqs, sampled_logprobs, *,
                     end_idx, target_token):
    """Returns (reward[B], score[B], loss scalar) from one fused Pallas kernel."""
    B, L = sampled_seqs.shape

    # Lane-major layout: B on lanes, (tiny) decode length L on sublanes.
    s_T = sampled_seqs.T.astype(jnp.int32)          # (L, B)
    g_T = greedy_seqs.T.astype(jnp.int32)           # (L, B)
    lp_T = sampled_logprobs.T.astype(jnp.float32)   # (L, B)

    tile_b = _pick_tile_b(B)
    grid = (B // tile_b,)

    kernel = functools.partial(_scst_loss_kernel, end_idx=end_idx,
                               target_token=target_token,
                               inv_len=float(1.0 / L))

    reward, score, per_ex_loss = pl.pallas_call(
        kernel,
        out_shape=(
            jax.ShapeDtypeStruct((1, B), jnp.float32),   # reward (lane-dense)
            jax.ShapeDtypeStruct((1, B), jnp.float32),   # sampled score
            jax.ShapeDtypeStruct((1, B), jnp.float32),   # per-example loss sum
        ),
        grid=grid,
        in_specs=[
            pl.BlockSpec((L, tile_b), lambda i: (0, i)),
            pl.BlockSpec((L, tile_b), lambda i: (0, i)),
            pl.BlockSpec((L, tile_b), lambda i: (0, i)),
        ],
        out_specs=(
            pl.BlockSpec((1, tile_b), lambda i: (0, i)),
            pl.BlockSpec((1, tile_b), lambda i: (0, i)),
            pl.BlockSpec((1, tile_b), lambda i: (0, i)),
        ),
        compiler_params=pltpu.CompilerParams(
            dimension_semantics=("parallel",),
            vmem_limit_bytes=32 * 1024 * 1024,
        ),
    )(s_T, g_T, lp_T)

    # Final batch mean over the tiny (1, B) slab stays in JAX.
    loss = jnp.mean(per_ex_loss)
    return reward[0], score[0], loss


# ----------------------------------------------------------------------------
# Deterministic stand-ins for the wrapped model + scorer (plain JAX glue)
# ----------------------------------------------------------------------------
TARGET_TOKEN = 3


class SyntheticCaptionModel:
    """Deterministic stand-in for the captioning model wrapped by ScstWrapper."""
    # TODO(synk): the real decoder (greedy / temperature sampling rollout) is an
    # autoregressive model; it is stubbed deterministically here.

    def __init__(self, vocab_size=20, start_idx=1, end_idx=9):
        self.vocab_size = vocab_size
        self.start_idx = start_idx
        self.end_idx = end_idx

    def __call__(self, feats, feat_lens, method="greedy", temperature=1.0,
                 max_length=8):
        B = feats.shape[0]
        salt = 0 if method == "greedy" else 1
        key = jax.random.fold_in(jax.random.PRNGKey(123), salt)
        k_seq, k_lp = jax.random.split(key)
        seqs = jax.random.randint(k_seq, (B, max_length), 0, self.vocab_size,
                                  dtype=jnp.int32)
        logprobs = jnp.log(jax.random.uniform(k_lp, (B, max_length),
                                              minval=0.1, maxval=1.0))
        return {"seqs": seqs, "sampled_logprobs": logprobs}


def synthetic_scorer(seqs, key2refs, keys, vocabulary, target_token=TARGET_TOKEN):
    """Deterministic stand-in for score_util.compute_batch_score (CIDEr etc.).

    The same math is fused inside the Pallas kernel; this copy is kept only for
    the standalone reference check.
    """
    # TODO(synk): real CIDEr/BLEU over reference captions has no Pallas equivalent.
    return jnp.mean((seqs == target_token).astype(jnp.float32), axis=1)


class ScstWrapper:
    def __init__(self, model):
        self.model = model

    def __call__(self, *inputs, **kwargs):
        if len(inputs) != 5 and len(inputs) != 2:
            raise Exception("number of input should be either 5 or 2!")
        if len(inputs) == 2:
            return self.model(*inputs, **kwargs)
        return self.scst(*inputs, **kwargs)

    def scst(self, feats, feat_lens, keys, key2refs, vocabulary, **kwargs):
        output = {}
        sample_kwargs = {"temperature": kwargs.get("temperature", 1.0),
                         "max_length": kwargs["max_length"]}
        sampled_greedy = self.model(feats, feat_lens, method="greedy",
                                    **sample_kwargs)
        output["greedy_seqs"] = sampled_greedy["seqs"]
        sampled = self.model(feats, feat_lens, method="sample", **sample_kwargs)
        output["sampled_seqs"] = sampled["seqs"]

        # One fused Pallas kernel: scorer reductions + reward + masked SCST loss.
        reward, score, loss = scst_loss_pallas(
            sampled["seqs"], sampled_greedy["seqs"],
            sampled["sampled_logprobs"],
            end_idx=self.model.end_idx, target_token=TARGET_TOKEN)

        output["reward"] = reward
        output["score"] = score
        output["loss"] = loss
        return output


# ----------------------------------------------------------------------------
# Pure-numpy reference (for a silent correctness check)
# ----------------------------------------------------------------------------
def _reference_loss(seqs, logp, s_score, g_score, end_idx):
    seqs = np.asarray(seqs); logp = np.asarray(logp)
    reward = np.asarray(s_score) - np.asarray(g_score)
    rew = np.repeat(reward[:, None], seqs.shape[-1], 1)
    mask = (seqs != end_idx).astype(np.float32)
    mask = np.concatenate([np.ones((mask.shape[0], 1), np.float32), mask[:, :-1]], 1)
    loss = -logp * rew * mask
    return reward, loss.sum(1).mean()


if __name__ == "__main__":
    B, T, F = 8, 16, 32          # batch, audio frames, feature dim
    MAX_LEN = 16                 # decode length

    key = jax.random.PRNGKey(0)
    feats = jax.random.normal(key, (B, T, F), dtype=jnp.float32)
    feat_lens = jnp.full((B,), T, dtype=jnp.int32)
    keys_meta = [f"audio_{i}" for i in range(B)]
    key2refs = {k: ["a reference caption"] for k in keys_meta}
    vocabulary = [f"tok{i}" for i in range(20)]

    model = SyntheticCaptionModel(vocab_size=20, start_idx=1, end_idx=9)
    wrapper = ScstWrapper(model)

    out = wrapper(feats, feat_lens, keys_meta, key2refs, vocabulary,
                  max_length=MAX_LEN, scorer=None)
    jax.block_until_ready(out["loss"])

    # silent correctness check against numpy reference
    sampled = model(feats, feat_lens, method="sample", max_length=MAX_LEN)
    greedy = model(feats, feat_lens, method="greedy", max_length=MAX_LEN)
    s_sc = synthetic_scorer(sampled["seqs"], None, None, None)
    g_sc = synthetic_scorer(greedy["seqs"], None, None, None)
    ref_reward, ref_loss = _reference_loss(sampled["seqs"],
                                           sampled["sampled_logprobs"],
                                           s_sc, g_sc, model.end_idx)
    np.testing.assert_allclose(np.asarray(out["reward"]), ref_reward,
                               rtol=1e-5, atol=1e-5)
    np.testing.assert_allclose(np.asarray(out["score"]), np.asarray(s_sc),
                               rtol=1e-5, atol=1e-5)
    np.testing.assert_allclose(float(out["loss"]), float(ref_loss),
                               rtol=1e-5, atol=1e-5)

    print("KERNEL_OK")
</pallas_src>

<mosaic_0001>
module attributes {stable_mosaic.version = 11 : i64} {
  func.func @_scst_loss_kernel(%arg0: i32, %arg1: memref<16x8xi32, #tpu.memory_space<vmem>>, %arg2: memref<16x8xi32, #tpu.memory_space<vmem>>, %arg3: memref<16x8xf32, #tpu.memory_space<vmem>>, %arg4: memref<1x8xf32, #tpu.memory_space<vmem>>, %arg5: memref<1x8xf32, #tpu.memory_space<vmem>>, %arg6: memref<1x8xf32, #tpu.memory_space<vmem>>) attributes {dimension_semantics = [#tpu.dimension_semantics<parallel>], iteration_bounds = array<i64: 1>, scalar_prefetch = 0 : i64, scratch_operands = 0 : i64, tpu.core_type = #tpu.core_type<tc>, window_params = [{transform_indices = @transform_0, window_bounds = array<i64: 16, 8>}, {transform_indices = @transform_1, window_bounds = array<i64: 16, 8>}, {transform_indices = @transform_2, window_bounds = array<i64: 16, 8>}, {transform_indices = @transform_3, window_bounds = array<i64: 1, 8>}, {transform_indices = @transform_4, window_bounds = array<i64: 1, 8>}, {transform_indices = @transform_5, window_bounds = array<i64: 1, 8>}]} {
    %c0 = arith.constant 0 : index
    %c0_0 = arith.constant 0 : index
    %0 = vector.load %arg1[%c0, %c0_0] : memref<16x8xi32, #tpu.memory_space<vmem>>, vector<16x8xi32>
    %c0_1 = arith.constant 0 : index
    %c0_2 = arith.constant 0 : index
    %1 = vector.load %arg2[%c0_1, %c0_2] : memref<16x8xi32, #tpu.memory_space<vmem>>, vector<16x8xi32>
    %c0_3 = arith.constant 0 : index
    %c0_4 = arith.constant 0 : index
    %2 = vector.load %arg3[%c0_3, %c0_4] : memref<16x8xf32, #tpu.memory_space<vmem>>, vector<16x8xf32>
    %c3_i32 = arith.constant 3 : i32
    %3 = vector.broadcast %c3_i32 : i32 to vector<16x8xi32>
    %4 = arith.cmpi eq, %0, %3 : vector<16x8xi32>
    %5 = arith.extui %4 : vector<16x8xi1> to vector<16x8xi32>
    %6 = arith.sitofp %5 : vector<16x8xi32> to vector<16x8xf32>
    %cst = arith.constant dense<0.000000e+00> : vector<8xf32>
    %7 = vector.multi_reduction <add>, %6, %cst [0] : vector<16x8xf32> to vector<8xf32>
    %8 = vector.shape_cast %7 : vector<8xf32> to vector<1x8xf32>
    %cst_5 = arith.constant 6.250000e-02 : f32
    %9 = vector.broadcast %cst_5 : f32 to vector<1x8xf32>
    %10 = arith.mulf %8, %9 : vector<1x8xf32>
    %c3_i32_6 = arith.constant 3 : i32
    %11 = vector.broadcast %c3_i32_6 : i32 to vector<16x8xi32>
    %12 = arith.cmpi eq, %1, %11 : vector<16x8xi32>
    %13 = arith.extui %12 : vector<16x8xi1> to vector<16x8xi32>
    %14 = arith.sitofp %13 : vector<16x8xi32> to vector<16x8xf32>
    %cst_7 = arith.constant dense<0.000000e+00> : vector<8xf32>
    %15 = vector.multi_reduction <add>, %14, %cst_7 [0] : vector<16x8xf32> to vector<8xf32>
    %16 = vector.shape_cast %15 : vector<8xf32> to vector<1x8xf32>
    %cst_8 = arith.constant 6.250000e-02 : f32
    %17 = vector.broadcast %cst_8 : f32 to vector<1x8xf32>
    %18 = arith.mulf %16, %17 : vector<1x8xf32>
    %19 = arith.subf %10, %18 : vector<1x8xf32>
    %c0_9 = arith.constant 0 : index
    %c0_10 = arith.constant 0 : index
    %20 = vector.load %arg4[%c0_9, %c0_10] : memref<1x8xf32, #tpu.memory_space<vmem>>, vector<1x8xf32>
    tpu.vector_store %arg4[%c0_9, %c0_10], %19 {strides = array<i32>} : memref<1x8xf32, #tpu.memory_space<vmem>>, vector<1x8xf32>,
    %c0_11 = arith.constant 0 : index
    %c0_12 = arith.constant 0 : index
    %21 = vector.load %arg5[%c0_11, %c0_12] : memref<1x8xf32, #tpu.memory_space<vmem>>, vector<1x8xf32>
    tpu.vector_store %arg5[%c0_11, %c0_12], %10 {strides = array<i32>} : memref<1x8xf32, #tpu.memory_space<vmem>>, vector<1x8xf32>,
    %c9_i32 = arith.constant 9 : i32
    %22 = vector.broadcast %c9_i32 : i32 to vector<16x8xi32>
    %23 = arith.cmpi ne, %0, %22 : vector<16x8xi32>
    %24 = arith.extui %23 : vector<16x8xi1> to vector<16x8xi32>
    %25 = arith.sitofp %24 : vector<16x8xi32> to vector<16x8xf32>
    %26 = tpu.iota {dimensions = array<i32: 0>} : vector<16x8xi32>
    %c1_i32 = arith.constant 1 : i32
    %27 = tpu.dynamic_rotate %25 by %c1_i32 dim 0 : vector<16x8xf32>, i32 -> vector<16x8xf32>
    %c0_i32 = arith.constant 0 : i32
    %28 = vector.broadcast %c0_i32 : i32 to vector<16x8xi32>
    %29 = arith.cmpi eq, %26, %28 : vector<16x8xi32>
    %cst_13 = arith.constant 1.000000e+00 : f32
    %30 = vector.broadcast %cst_13 : f32 to vector<16x8xf32>
    %31 = arith.select %29, %30, %27 : vector<16x8xi1>, vector<16x8xf32>
    %cst_14 = arith.constant 0.000000e+00 : f32
    %32 = vector.broadcast %cst_14 : f32 to vector<16x8xf32>
    %33 = arith.subf %32, %2 : vector<16x8xf32>
    %34 = vector.broadcast %19 : vector<1x8xf32> to vector<16x8xf32>
    %35 = arith.mulf %33, %34 : vector<16x8xf32>
    %36 = arith.mulf %35, %31 : vector<16x8xf32>
    %cst_15 = arith.constant dense<0.000000e+00> : vector<8xf32>
    %37 = vector.multi_reduction <add>, %36, %cst_15 [0] : vector<16x8xf32> to vector<8xf32>
    %38 = vector.shape_cast %37 : vector<8xf32> to vector<1x8xf32>
    %c0_16 = arith.constant 0 : index
    %c0_17 = arith.constant 0 : index
    %39 = vector.load %arg6[%c0_16, %c0_17] : memref<1x8xf32, #tpu.memory_space<vmem>>, vector<1x8xf32>
    tpu.vector_store %arg6[%c0_16, %c0_17], %38 {strides = array<i32>} : memref<1x8xf32, #tpu.memory_space<vmem>>, vector<1x8xf32>,
    return
  }
  func.func @transform_0(%arg0: i32) -> (i32, i32) {
    %c0_i32 = arith.constant 0 : i32
    %c0_i32_0 = arith.constant 0 : i32
    return %c0_i32, %arg0 : i32, i32
  }
  func.func @transform_1(%arg0: i32) -> (i32, i32) {
    %c0_i32 = arith.constant 0 : i32
    %c0_i32_0 = arith.constant 0 : i32
    return %c0_i32, %arg0 : i32, i32
  }
  func.func @transform_2(%arg0: i32) -> (i32, i32) {
    %c0_i32 = arith.constant 0 : i32
    %c0_i32_0 = arith.constant 0 : i32
    return %c0_i32, %arg0 : i32, i32
  }
  func.func @transform_3(%arg0: i32) -> (i32, i32) {
    %c0_i32 = arith.constant 0 : i32
    %c0_i32_0 = arith.constant 0 : i32
    return %c0_i32, %arg0 : i32, i32
  }
  func.func @transform_4(%arg0: i32) -> (i32, i32) {
    %c0_i32 = arith.constant 0 : i32
    %c0_i32_0 = arith.constant 0 : i32
    return %c0_i32, %arg0 : i32, i32
  }
  func.func @transform_5(%arg0: i32) -> (i32, i32) {
    %c0_i32 = arith.constant 0 : i32
    %c0_i32_0 = arith.constant 0 : i32
    return %c0_i32, %arg0 : i32, i32
  }
}

</mosaic_0001>

<llo_original>
// kernel: tpu_custom_call.1
$region0: #{tpu_custom_call.1}
  #allocation0 [shape = 'u32[]', space=smem, size = 0x4, offset = 0x4, fixed_abs, tag = 'smem constant byte address 0x4 - core index']
  #allocation1 [shape = 'u32[144,128]{1,0:T(1,128)}', space=vmem, size = 0x12000, scoped, tag = 'internal scratch']
  %s0 = inlined_call_operand.vmem [shape: s32[16,8], index: 0, kind: input, shape index: {}]
  %s1 = inlined_call_operand.vmem [shape: s32[16,8], index: 1, kind: input, shape index: {}]
  %s2 = inlined_call_operand.vmem [shape: f32[16,8], index: 2, kind: input, shape index: {}]
  %s3 = inlined_call_operand.hbm [shape: f32[1,8], index: 3, kind: output, shape index: {0}]
  %s4 = inlined_call_operand.hbm [shape: f32[1,8], index: 4, kind: output, shape index: {1}]
  %s5 = inlined_call_operand.hbm [shape: f32[1,8], index: 5, kind: output, shape index: {2}]
  %6 = xla_tuple %s3, %s4, %s5
  %s7 = sld [smem:[#allocation0]]
  $region38: #{tpu_custom_call.1} parent=0
    _
  %s9 = ssub.s32 1, %s7
  %s10 = scalar_select 0, %s9, %s7
  $region1: #{tpu_custom_call.1} parent=0
    #allocation2 [shape = 'u8[512]{0}', space=vmem, size = 0x400, scoped, tag = 'output window, operand 0, single buffered']
    #allocation3 [shape = 's32[1]{0}', space=sflag, size = 0x4, scoped, tag = 'scoped memory for tpu_custom_call.1']
    #allocation4 [shape = 'u8[512]{0}', space=vmem, size = 0x400, scoped, tag = 'output window, operand 1, single buffered']
    #allocation5 [shape = 's32[1]{0}', space=sflag, size = 0x4, scoped, tag = 'scoped memory for tpu_custom_call.1']
    #allocation6 [shape = 'u8[512]{0}', space=vmem, size = 0x400, scoped, tag = 'output window, operand 2, single buffered']
    %11 = vsyncpa [#allocation3], 0
    %12 = vsyncpa [#allocation5], 0
    // Predicated region
    $region2: #{tpu_custom_call.1} parent=1 // pred_check
      _
    $region3: #{tpu_custom_call.1} parent=1 // pred_check_branch
      %14 = sbr.rel (0) target = $region5
    $region4: #{tpu_custom_call.1} parent=1 // pred_region
      _
    $region5: #{tpu_custom_call.1} parent=1 // pred_fallthru
      _
    // Predicated region
    $region6: #{tpu_custom_call.1} parent=1 // pred_check
      _
    $region7: #{tpu_custom_call.1} parent=1 // pred_check_branch
      %16 = sbr.rel (0) target = $region9
    $region8: #{tpu_custom_call.1} parent=1 // pred_region
      _
    $region9: #{tpu_custom_call.1} parent=1 // pred_fallthru
      _
    // Predicated region
    $region10: #{tpu_custom_call.1} parent=1 // pred_check
      _
    $region11: #{tpu_custom_call.1} parent=1 // pred_check_branch
      %18 = sbr.rel (0) target = $region13
    $region12: #{tpu_custom_call.1} parent=1 // pred_region
      _
    $region13: #{tpu_custom_call.1} parent=1 // pred_fallthru
      _
    %v19 = vld [vmem:[%s0] sm:$0xff]
    %v20 = vld [vmem:[%s0 + $0x8] sm:$0xff]
    %v21 = vld [vmem:[%s1] sm:$0xff]
    %v22 = vld [vmem:[%s1 + $0x8] sm:$0xff]
    %v23 = vld [vmem:[%s2] sm:$0xff]
    %v24 = vld [vmem:[%s2 + $0x8] sm:$0xff]
    %vm25 = vcmp.eq.s32.totalorder %v19, 3
    %vm26 = vcmp.eq.s32.totalorder %v20, 3
    %v27 = vsel %vm25, 1, 0
    %v28 = vsel %vm26, 1, 0
    %v29 = vcvt.s32.f32 %v27
    %v30 = vcvt.s32.f32 %v28
    %vm31 = vcmask 64512
    %v32 = vsel %vm31, %v29, 0.0
    %v33 = vsel %vm31, %v30, 0.0
    %v34 = vadd.f32 %v32, %v33
    %v35 = vrot.slane %v34, 4
    %v36 = vadd.f32 %v34, %v35
    %v37 = vrot.slane %v36, 2
    %v38 = vadd.f32 %v36, %v37
    %v39 = vrot.slane %v38, 1
    %v40 = vadd.f32 %v38, %v39
    %v41 = vmul.f32 %v40, 0.0625
    %vm42 = vcmp.eq.s32.totalorder %v21, 3
    %vm43 = vcmp.eq.s32.totalorder %v22, 3
    %v44 = vsel %vm42, 1, 0
    %v45 = vsel %vm43, 1, 0
    %v46 = vcvt.s32.f32 %v44
    %v47 = vcvt.s32.f32 %v45
    %v48 = vsel %vm31, %v46, 0.0
    %v49 = vsel %vm31, %v47, 0.0
    %v50 = vadd.f32 %v48, %v49
    %v51 = vrot.slane %v50, 4
    %v52 = vadd.f32 %v50, %v51
    %v53 = vrot.slane %v52, 2
    %v54 = vadd.f32 %v52, %v53
    %v55 = vrot.slane %v54, 1
    %v56 = vadd.f32 %v54, %v55
    %v57 = vmul.f32 %v56, 0.0625
    %v58 = vsub.f32 %v41, %v57
    %vm59 = vcmask 57344
    %60 = vst.msk [vmem:[#allocation2] sm:$0x1] %vm59, %v58
    %61 = vst.msk [vmem:[#allocation4] sm:$0x1] %vm59, %v41
    %vm62 = vcmp.ne.s32.totalorder %v19, 9
    %vm63 = vcmp.ne.s32.totalorder %v20, 9
    %v64 = vsel %vm62, 1, 0
    %v65 = vsel %vm63, 1, 0
    %v66 = vcvt.s32.f32 %v64
    %v67 = vcvt.s32.f32 %v65
    %v68 = vlaneseq
    %v69 = vshrl.u32 %v68, 7
    %v70 = vadd.s32 %v69, 8
    %v71 = vrot.slane %v66, 7
    %v72 = vrot.slane %v67, 7
    %vm73 = vcmp.lt.s32.totalorder %v69, 1
    %v74 = vsel %vm73, %v71, %v72
    %v75 = vsel %vm73, %v72, %v71
    %vm76 = vcmp.eq.s32.totalorder %v69, 0
    %vm77 = vcmp.eq.s32.totalorder %v70, 0
    %v78 = vsel %vm76, 1.0, %v75
    %v79 = vsel %vm77, 1.0, %v74
    %v80 = vsub.f32 0.0, %v23
    %v81 = vsub.f32 0.0, %v24
    %v82 = vmul.f32 %v80, %v58
    %v83 = vmul.f32 %v81, %v58
    %v84 = vmul.f32 %v82, %v78
    %v85 = vmul.f32 %v83, %v79
    %v86 = vsel %vm31, %v84, 0.0
    %v87 = vsel %vm31, %v85, 0.0
    %v88 = vadd.f32 %v86, %v87
    %v89 = vrot.slane %v88, 4
    %v90 = vadd.f32 %v88, %v89
    %v91 = vrot.slane %v90, 2
    %v92 = vadd.f32 %v90, %v91
    %v93 = vrot.slane %v92, 1
    %v94 = vadd.f32 %v92, %v93
    %95 = vst.msk [vmem:[#allocation6] sm:$0x1] %vm59, %v94
    // Predicated region
    $region14: #{tpu_custom_call.1} parent=1 // pred_check
      _
    $region15: #{tpu_custom_call.1} parent=1 // pred_check_branch
      %97 = sbr.rel (0) target = $region17
    $region16: #{tpu_custom_call.1} parent=1 // pred_region
      %s99 = ssub.s32 16, 16
      %100 = vsyncadd [#allocation3], %s99
      %s102 = sshll.u32 [#allocation2], 4
      %s103 = int_to_ptr.vmem [resolvable:$true] %s102
      %105 = dma.vmem_to_hbm [thread:$0]  %s103, 16, %s3, [#allocation3]
    $region17: #{tpu_custom_call.1} parent=1 // pred_fallthru
      _
    // Predicated region
    $region18: #{tpu_custom_call.1} parent=1 // pred_check
      _
    $region19: #{tpu_custom_call.1} parent=1 // pred_check_branch
      %107 = sbr.rel (0) target = $region21
    $region20: #{tpu_custom_call.1} parent=1 // pred_region
      %s109 = ssub.s32 16, 16
      %110 = vsyncadd [#allocation5], %s109
      %s112 = sshll.u32 [#allocation4], 4
      %s113 = int_to_ptr.vmem [resolvable:$true] %s112
      %115 = dma.vmem_to_hbm [thread:$0]  %s113, 16, %s4, [#allocation5]
    $region21: #{tpu_custom_call.1} parent=1 // pred_fallthru
      _
    // Predicated region
    $region22: #{tpu_custom_call.1} parent=1 // pred_check
      _
    $region23: #{tpu_custom_call.1} parent=1 // pred_check_branch
      %117 = sbr.rel (0) target = $region25
    $region24: #{tpu_custom_call.1} parent=1 // pred_region
      %s119 = ssub.s32 16, 16
      %120 = vsyncadd [#allocation5], %s119
      %s122 = sshll.u32 [#allocation6], 4
      %s123 = int_to_ptr.vmem [resolvable:$true] %s122
      %125 = dma.vmem_to_hbm [thread:$0]  %s123, 16, %s5, [#allocation5]
    $region25: #{tpu_custom_call.1} parent=1 // pred_fallthru
      _
    // Predicated region
    $region26: #{tpu_custom_call.1} parent=1 // pred_check
      _
    $region27: #{tpu_custom_call.1} parent=1 // pred_check_branch
      %127 = sbr.rel (0) target = $region29
    $region28: #{tpu_custom_call.1} parent=1 // pred_region
      %128 = dma.done [#allocation3], 16
    $region29: #{tpu_custom_call.1} parent=1 // pred_fallthru
      _
    // Predicated region
    $region30: #{tpu_custom_call.1} parent=1 // pred_check
      _
    $region31: #{tpu_custom_call.1} parent=1 // pred_check_branch
      %130 = sbr.rel (0) target = $region33
    $region32: #{tpu_custom_call.1} parent=1 // pred_region
      %131 = dma.done [#allocation5], 16
    $region33: #{tpu_custom_call.1} parent=1 // pred_fallthru
      _
    // Predicated region
    $region34: #{tpu_custom_call.1} parent=1 // pred_check
      _
    $region35: #{tpu_custom_call.1} parent=1 // pred_check_branch
      %133 = sbr.rel (0) target = $region37
    $region36: #{tpu_custom_call.1} parent=1 // pred_region
      %134 = dma.done [#allocation5], 16
    $region37: #{tpu_custom_call.1} parent=1 // pred_fallthru
      _
    %135 = vsyncpa [#allocation3], 1
    %136 = vsyncpa [#allocation5], 1

</llo_original>
